<compile_context>
chip_gen: v7x
topology: tpu7x:2x2x1
jax: 0.10.0
libtpu: 0.0.40
codegen_flags: <defaults>
</compile_context>

<pallas_src>
import functools

import jax
import jax.numpy as jnp
from jax.experimental import pallas as pl
from jax.experimental.pallas import tpu as pltpu

IGNORE_INDEX = 255


def _round_up(x, m):
    return ((x + m - 1) // m) * m


def _cdiv(a, b):
    return (a + b - 1) // b


# ----------------------------------------------------------------------------
# Hardware-aware sizing helpers
# ----------------------------------------------------------------------------
def _device_kind():
    try:
        return jax.devices()[0].device_kind.lower()
    except Exception:
        return ""


def _vmem_physical_bytes():
    try:
        return int(pltpu.get_tpu_info().vmem_capacity_bytes)
    except Exception:
        pass
    if "v7" in _device_kind():
        return 64 << 20
    return 128 << 20


def _vmem_budget():
    """(usable bytes for tile sizing, vmem_limit_bytes) per TPU generation."""
    phys = _vmem_physical_bytes()
    if phys <= (64 << 20):
        # v7x-class: 64 MiB physical -> stay inside the 32 MiB scoped default.
        limit = 32 << 20
    else:
        # v5e / v6e: 128 MiB physical; raise the scoped limit past the
        # 16 MiB (v5e) / 32 MiB (v6e) defaults so larger tiles are legal.
        limit = 64 << 20
    usable = (limit * 3) // 5          # ~40% headroom for compiler scratch
    return usable, limit


def _bf16_compute_ok():
    # bf16 VALU/EUP only exist on v6e and newer; compute in f32 on v2-v5.
    kind = _device_kind()
    return not any(v in kind for v in ("v2", "v3", "v4", "v5"))


def _pick_tile_p(P, N, C, in_itemsize, comp_itemsize, usable_vmem_bytes):
    """Pixel-tile (lane) count per grid step."""
    # Per-lane VMEM: 2x double-buffered logits block + ~4 block-sized kernel
    # temporaries (z, exp, class-iota, onehot) + ~12 pixel-vector temporaries
    # plus double-buffered target/output blocks.
    bytes_per_lane = 2 * C * in_itemsize + 4 * C * comp_itemsize + 48
    tp_budget = max(128, (usable_vmem_bytes // bytes_per_lane) // 128 * 128)
    # Keep >= ~8 total grid steps (>= 2 per TensorCore under megacore) so the
    # grid pipeline has a next-tile DMA to hide behind compute, but never drop
    # below 1024 lanes where the ~0.35us/step overhead dominates again.
    steps_per_img = max(1, _cdiv(8, N))
    tp_steps = _round_up(_cdiv(P, steps_per_img), 128)
    tp = min(tp_budget, max(tp_steps, 1024))
    if P <= tp:
        return P             # full pixel axis: always a legal block shape
    return tp                # multiple of 128; Pallas masks the partial tail


def _ignore_value_for(dtype):
    """IGNORE_INDEX as it appears after storing in `dtype` (int8: 255 -> -1)."""
    dt = jnp.dtype(dtype)
    if not jnp.issubdtype(dt, jnp.integer):
        return IGNORE_INDEX
    if IGNORE_INDEX > jnp.iinfo(dt).max:
        return IGNORE_INDEX - (1 << (8 * dt.itemsize))
    return IGNORE_INDEX


# ----------------------------------------------------------------------------
# Kernel
# ----------------------------------------------------------------------------
def _focal_loss_kernel(logits_ref, tgt_ref, *rest, gamma, has_alpha,
                       reduce_sum, ignore_value, compute_f32, p_total):
    # logits_ref: (1, C, TP)    tgt_ref: (1, 1, TP) (native int dtype)
    # [alpha_ref: (1, C, 1) f32]   out_ref: (1, 1, TP) f32  or  (1, 1, 1) f32
    if has_alpha:
        alpha_ref, out_ref = rest
    else:
        alpha_ref, out_ref = None, rest[0]

    x = logits_ref[0]                                     # (C, TP)
    if compute_f32:
        x = x.astype(jnp.float32)
    t = tgt_ref[0].astype(jnp.int32)                      # (1, TP)
    C, TP = x.shape

    # ---- validity mask (ignore_index + padded tail lanes) ----------------
    valid = t != ignore_value                             # (1, TP)
    if p_total % TP != 0:
        lane = jax.lax.broadcasted_iota(jnp.int32, (1, TP), 1)
        pix = pl.program_id(1) * TP + lane
        valid = jnp.logical_and(valid, pix < p_total)
    t_safe = jnp.where(valid, t, 0)                       # safe gather index

    # ---- log-softmax pieces over the class (sublane) axis ----------------
    m = jnp.max(x, axis=0, keepdims=True)                 # (1, TP)
    ez = jnp.exp(x - m)                                   # (C, TP)
    lse = jnp.log(jnp.sum(ez, axis=0, keepdims=True, dtype=jnp.float32))

    cls = jax.lax.broadcasted_iota(jnp.int32, x.shape, 0)  # (C, TP)
    onehot = (cls == t_safe).astype(x.dtype)               # (C, TP)
    # TODO(synk): sum(x*onehot) maps +/-inf or NaN in NON-target classes to
    # NaN for that pixel, unlike the reference's gather; only differs for
    # non-finite logits.
    x_t = jnp.sum(x * onehot, axis=0, keepdims=True, dtype=jnp.float32)

    logpt = x_t - m.astype(jnp.float32) - lse              # (1, TP) f32
    pt = jnp.exp(logpt)

    if has_alpha:
        at = jnp.sum(alpha_ref[0] * onehot.astype(jnp.float32),
                     axis=0, keepdims=True)                # alpha[target]
        logpt_w = logpt * at
    else:
        logpt_w = logpt

    g = float(gamma)
    one_minus_pt = 1.0 - pt
    if g == 2.0:
        mod = one_minus_pt * one_minus_pt                  # VPU muls, no pow
    elif g == int(g) and 0.0 <= g <= 8.0:
        mod = jnp.ones_like(pt)
        for _ in range(int(g)):
            mod = mod * one_minus_pt
    else:
        mod = jnp.maximum(one_minus_pt, 0.0) ** g

    loss = jnp.where(valid, -1.0 * mod * logpt_w, 0.0)     # (1, TP) f32

    if reduce_sum:
        @pl.when(pl.program_id(1) == 0)
        def _():
            out_ref[...] = jnp.zeros_like(out_ref)
        out_ref[...] += jnp.sum(loss).reshape(1, 1, 1)
    else:
        out_ref[0] = loss


# ----------------------------------------------------------------------------
# Wrapper
# ----------------------------------------------------------------------------
def focal_loss(logits_nchw, target_nhw, *, gamma=2.0, alpha=None,
               size_average=True, tile_p=None):
    """Focal loss matching utils/focal_loss.py::FocalLoss.forward.

    logits_nchw: (N, C, H, W) float32 / bfloat16
    target_nhw : (N, H, W)    integer class indices (255 = ignore)
    """
    N, C, H, W = logits_nchw.shape
    P = H * W

    # Native-layout views only: no transpose/concatenate copies of logits and
    # no int32 copy of targets.
    x = logits_nchw.reshape(N, C, P)
    t = target_nhw.reshape(N, 1, P)

    if x.dtype not in (jnp.float32, jnp.bfloat16):
        x = x.astype(jnp.float32)
    in_itemsize = jnp.dtype(x.dtype).itemsize
    compute_f32 = (x.dtype == jnp.float32) or (not _bf16_compute_ok())
    comp_itemsize = 4 if compute_f32 else in_itemsize

    usable, vmem_limit = _vmem_budget()
    if tile_p is not None:
        tp = P if tile_p >= P else tile_p
    else:
        tp = _pick_tile_p(P, N, C, in_itemsize, comp_itemsize, usable)
    grid = (N, _cdiv(P, tp))

    has_alpha = alpha is not None
    in_specs = [
        pl.BlockSpec((1, C, tp), lambda n, p: (n, 0, p)),   # logits, pixels on lanes
        pl.BlockSpec((1, 1, tp), lambda n, p: (n, 0, p)),   # targets, lane-dense
    ]
    args = [x, t]
    if has_alpha:
        alpha_arr = jnp.broadcast_to(
            jnp.asarray(alpha, jnp.float32).reshape(-1), (C,)).reshape(1, C, 1)
        in_specs.append(pl.BlockSpec((1, C, 1), lambda n, p: (0, 0, 0)))
        args.append(alpha_arr)

    reduce_sum = not size_average
    if reduce_sum:
        # Per-image partial sums accumulated in a VMEM-resident output block
        # across the (arbitrary) pixel axis: no (N,P) f32 HBM round-trip.
        out_shape = jax.ShapeDtypeStruct((N, 1, 1), jnp.float32)
        out_spec = pl.BlockSpec((1, 1, 1), lambda n, p: (n, 0, 0))
        dims = ("parallel", "arbitrary")
    else:
        out_shape = jax.ShapeDtypeStruct((N, 1, P), jnp.float32)
        out_spec = pl.BlockSpec((1, 1, tp), lambda n, p: (n, 0, p))
        dims = ("parallel", "parallel")

    kernel = functools.partial(
        _focal_loss_kernel,
        gamma=float(gamma),
        has_alpha=has_alpha,
        reduce_sum=reduce_sum,
        ignore_value=_ignore_value_for(t.dtype),
        compute_f32=compute_f32,
        p_total=P,
    )

    out = pl.pallas_call(
        kernel,
        out_shape=out_shape,
        grid_spec=pltpu.PrefetchScalarGridSpec(
            num_scalar_prefetch=0,
            grid=grid,
            in_specs=in_specs,
            out_specs=out_spec,
        ),
        compiler_params=pltpu.CompilerParams(
            dimension_semantics=dims,
            vmem_limit_bytes=vmem_limit),
    )(*args)

    if size_average:
        # (N, 1, P) -> (N*P,) matches the reference's
        # view(N,C,-1).transpose(1,2).view(-1,C) row order.
        # TODO(synk): the PyTorch reference boolean-mask-compacts ignore_index
        # pixels out of the returned vector (dynamic shape); here they carry 0,
        # which matches any subsequent .sum() but not a .mean() denominator.
        return out.reshape(-1)
    return jnp.sum(out)   # tiny (N,) reduce of per-image partial sums


# ----------------------------------------------------------------------------
# Pure-JAX reference
# ----------------------------------------------------------------------------
def _reference(logits_nchw, target_nhw, gamma=2.0, alpha=None):
    N, C, H, W = logits_nchw.shape
    x = jnp.transpose(logits_nchw, (0, 2, 3, 1)).reshape(-1, C).astype(jnp.float32)
    t = target_nhw.reshape(-1).astype(jnp.int32)
    logp = jax.nn.log_softmax(x, axis=-1)
    logpt = jnp.take_along_axis(logp, jnp.clip(t, 0, C - 1)[:, None], axis=1)[:, 0]
    pt = jnp.exp(logpt)
    if alpha is not None:
        logpt = logpt * jnp.asarray(alpha, jnp.float32)[jnp.clip(t, 0, C - 1)]
    return -1.0 * (1.0 - pt) ** gamma * logpt


if __name__ == "__main__":
    key = jax.random.PRNGKey(0)
    k1, k2, k3, k4, k5 = jax.random.split(key, 5)

    # ---- test 1: f32, no alpha, per-pixel output --------------------------
    N, C, H, W = 2, 4, 16, 16
    logits = jax.random.normal(k1, (N, C, H, W), jnp.float32)
    target = jax.random.randint(k2, (N, H, W), 0, C, jnp.int32)

    out = jax.block_until_ready(
        focal_loss(logits, target, gamma=2.0, alpha=None, size_average=True))
    ref = _reference(logits, target, gamma=2.0, alpha=None)
    assert out.shape == ref.shape, (out.shape, ref.shape)
    assert jnp.allclose(out, ref, atol=1e-5, rtol=1e-5), float(
        jnp.max(jnp.abs(out - ref)))

    # ---- test 2: per-class alpha + ignore pixels, in-kernel sum -----------
    alpha = jax.random.uniform(k3, (C,), jnp.float32, 0.25, 1.0)
    ign = jax.random.bernoulli(k4, 0.2, (N, H, W))
    target_ign = jnp.where(ign, IGNORE_INDEX, target).astype(jnp.int32)
    out2 = jax.block_until_ready(
        focal_loss(logits, target_ign, gamma=2.0, alpha=alpha, size_average=False))
    ref2 = jnp.sum(jnp.where(target_ign.reshape(-1) != IGNORE_INDEX,
                             _reference(logits, target_ign, 2.0, alpha), 0.0))
    assert jnp.allclose(out2, ref2, atol=1e-3, rtol=1e-5), float(jnp.abs(out2 - ref2))

    # ---- test 3: non-divisible pixel count with forced small tile ---------
    # (exercises padded-tail lane masking + multi-step in-kernel accumulation)
    N3, C3, H3, W3 = 2, 5, 18, 18            # P = 324, tile_p = 128 -> partial tail
    logits3 = jax.random.normal(k5, (N3, C3, H3, W3), jnp.float32)
    target3 = jax.random.randint(k2, (N3, H3, W3), 0, C3, jnp.int32)
    target3 = jnp.where(jax.random.bernoulli(k3, 0.1, (N3, H3, W3)),
                        IGNORE_INDEX, target3).astype(jnp.int32)
    out3 = jax.block_until_ready(
        focal_loss(logits3, target3, gamma=2.0, alpha=None,
                   size_average=False, tile_p=128))
    ref3 = jnp.sum(jnp.where(target3.reshape(-1) != IGNORE_INDEX,
                             _reference(logits3, target3, 2.0, None), 0.0))
    assert jnp.allclose(out3, ref3, atol=1e-3, rtol=1e-5), float(jnp.abs(out3 - ref3))

    # ---- test 4: bf16 logits (bf16 compute on v6e/v7x, f32 fallback on v5-) -
    logits_bf16 = logits.astype(jnp.bfloat16)
    out4 = jax.block_until_ready(
        focal_loss(logits_bf16, target, gamma=2.0, alpha=None, size_average=False))
    ref4 = jnp.sum(_reference(logits_bf16.astype(jnp.float32), target, 2.0, None))
    assert jnp.allclose(out4, ref4, atol=1.0, rtol=0.05), (float(out4), float(ref4))

    print("KERNEL_OK")
</pallas_src>

<mosaic_0001>
module attributes {stable_mosaic.version = 11 : i64} {
  func.func @_focal_loss_kernel(%arg0: i32, %arg1: i32, %arg2: memref<1x4x256xf32, #tpu.memory_space<vmem>>, %arg3: memref<1x1x256xi32, #tpu.memory_space<vmem>>, %arg4: memref<1x1x256xf32, #tpu.memory_space<vmem>>) attributes {dimension_semantics = [#tpu.dimension_semantics<parallel>, #tpu.dimension_semantics<parallel>], iteration_bounds = array<i64: 2, 1>, scalar_prefetch = 0 : i64, scratch_operands = 0 : i64, tpu.core_type = #tpu.core_type<tc>, window_params = [{transform_indices = @transform_0, window_bounds = array<i64: 1, 4, 256>}, {transform_indices = @transform_1, window_bounds = array<i64: 1, 1, 256>}, {transform_indices = @transform_2, window_bounds = array<i64: 1, 1, 256>}]} {
    %c0 = arith.constant 0 : index
    %c0_0 = arith.constant 0 : index
    %c0_1 = arith.constant 0 : index
    %0 = vector.load %arg2[%c0, %c0_0, %c0_1] : memref<1x4x256xf32, #tpu.memory_space<vmem>>, vector<1x4x256xf32>
    %1 = vector.shape_cast %0 : vector<1x4x256xf32> to vector<4x256xf32>
    %c0_2 = arith.constant 0 : index
    %c0_3 = arith.constant 0 : index
    %c0_4 = arith.constant 0 : index
    %2 = vector.load %arg3[%c0_2, %c0_3, %c0_4] : memref<1x1x256xi32, #tpu.memory_space<vmem>>, vector<1x1x256xi32>
    %3 = vector.shape_cast %2 : vector<1x1x256xi32> to vector<1x256xi32>
    %c255_i32 = arith.constant 255 : i32
    %4 = vector.broadcast %c255_i32 : i32 to vector<1x256xi32>
    %5 = arith.cmpi ne, %3, %4 : vector<1x256xi32>
    %c0_i32 = arith.constant 0 : i32
    %6 = vector.broadcast %c0_i32 : i32 to vector<1x256xi32>
    %7 = arith.select %5, %3, %6 : vector<1x256xi1>, vector<1x256xi32>
    %cst = arith.constant dense<0xFF800000> : vector<256xf32>
    %8 = vector.multi_reduction <maximumf>, %1, %cst [0] : vector<4x256xf32> to vector<256xf32>
    %9 = vector.shape_cast %8 : vector<256xf32> to vector<1x256xf32>
    %10 = vector.broadcast %9 : vector<1x256xf32> to vector<4x256xf32>
    %11 = arith.subf %1, %10 : vector<4x256xf32>
    %12 = math.exp %11 : vector<4x256xf32>
    %cst_5 = arith.constant dense<0.000000e+00> : vector<256xf32>
    %13 = vector.multi_reduction <add>, %12, %cst_5 [0] : vector<4x256xf32> to vector<256xf32>
    %14 = vector.shape_cast %13 : vector<256xf32> to vector<1x256xf32>
    %15 = math.log %14 : vector<1x256xf32>
    %16 = tpu.iota {dimensions = array<i32: 0>} : vector<4x256xi32>
    %17 = vector.broadcast %7 : vector<1x256xi32> to vector<4x256xi32>
    %18 = arith.cmpi eq, %16, %17 : vector<4x256xi32>
    %19 = arith.extui %18 : vector<4x256xi1> to vector<4x256xi32>
    %20 = arith.sitofp %19 : vector<4x256xi32> to vector<4x256xf32>
    %21 = arith.mulf %1, %20 : vector<4x256xf32>
    %cst_6 = arith.constant dense<0.000000e+00> : vector<256xf32>
    %22 = vector.multi_reduction <add>, %21, %cst_6 [0] : vector<4x256xf32> to vector<256xf32>
    %23 = vector.shape_cast %22 : vector<256xf32> to vector<1x256xf32>
    %24 = arith.subf %23, %9 : vector<1x256xf32>
    %25 = arith.subf %24, %15 : vector<1x256xf32>
    %26 = math.exp %25 : vector<1x256xf32>
    %cst_7 = arith.constant 1.000000e+00 : f32
    %27 = vector.broadcast %cst_7 : f32 to vector<1x256xf32>
    %28 = arith.subf %27, %26 : vector<1x256xf32>
    %29 = arith.mulf %28, %28 : vector<1x256xf32>
    %cst_8 = arith.constant -1.000000e+00 : f32
    %30 = vector.broadcast %cst_8 : f32 to vector<1x256xf32>
    %31 = arith.mulf %30, %29 : vector<1x256xf32>
    %32 = arith.mulf %31, %25 : vector<1x256xf32>
    %cst_9 = arith.constant 0.000000e+00 : f32
    %33 = vector.broadcast %cst_9 : f32 to vector<1x256xf32>
    %34 = arith.select %5, %32, %33 : vector<1x256xi1>, vector<1x256xf32>
    %c0_10 = arith.constant 0 : index
    %c0_11 = arith.constant 0 : index
    %c0_12 = arith.constant 0 : index
    %35 = vector.load %arg4[%c0_10, %c0_11, %c0_12] : memref<1x1x256xf32, #tpu.memory_space<vmem>>, vector<1x1x256xf32>
    %36 = vector.shape_cast %35 : vector<1x1x256xf32> to vector<1x256xf32>
    %37 = vector.shape_cast %34 : vector<1x256xf32> to vector<1x1x256xf32>
    tpu.vector_store %arg4[%c0_10, %c0_11, %c0_12], %37 {strides = array<i32>} : memref<1x1x256xf32, #tpu.memory_space<vmem>>, vector<1x1x256xf32>,
    return
  }
  func.func @transform_0(%arg0: i32, %arg1: i32) -> (i32, i32, i32) {
    %c0_i32 = arith.constant 0 : i32
    %c0_i32_0 = arith.constant 0 : i32
    return %arg0, %c0_i32, %arg1 : i32, i32, i32
  }
  func.func @transform_1(%arg0: i32, %arg1: i32) -> (i32, i32, i32) {
    %c0_i32 = arith.constant 0 : i32
    %c0_i32_0 = arith.constant 0 : i32
    return %arg0, %c0_i32, %arg1 : i32, i32, i32
  }
  func.func @transform_2(%arg0: i32, %arg1: i32) -> (i32, i32, i32) {
    %c0_i32 = arith.constant 0 : i32
    %c0_i32_0 = arith.constant 0 : i32
    return %arg0, %c0_i32, %arg1 : i32, i32, i32
  }
}

</mosaic_0001>

<llo_original>
// kernel: tpu_custom_call.1
$region0: #{tpu_custom_call.1}
  #allocation0 [shape = 'u32[]', space=smem, size = 0x4, offset = 0x4, fixed_abs, tag = 'smem constant byte address 0x4 - core index']
  #allocation1 [shape = 'u32[144,128]{1,0:T(1,128)}', space=vmem, size = 0x12000, scoped, tag = 'internal scratch']
  %s0 = inlined_call_operand.hbm [shape: f32[2,4,256], index: 0, kind: input, shape index: {}]
  %s1 = inlined_call_operand.hbm [shape: s32[2,1,256], index: 1, kind: input, shape index: {}]
  %s2 = inlined_call_operand.hbm [shape: f32[2,1,256], index: 2, kind: output, shape index: {}]
  %s3 = sld [smem:[#allocation0]]
  $region49: #{tpu_custom_call.1} parent=0
    _
  %s5 = ssub.s32 1, %s3
  %s6 = scalar_select 0, %s5, %s3
  $region1: #{tpu_custom_call.1} parent=0
    #allocation2 [shape = 'u8[8192]{0}', space=vmem, size = 0x2000, scoped, tag = 'input window, operand 0']
    #allocation3 [shape = 's32[2]{0}', space=sflag, size = 0x8, scoped, tag = 'scoped memory for tpu_custom_call.1']
    #allocation4 [shape = 's32[2]{0}', space=sflag, size = 0x8, scoped, tag = 'scoped memory for tpu_custom_call.1']
    #allocation5 [shape = 'u8[2048]{0}', space=vmem, size = 0x800, scoped, tag = 'input window, operand 1']
    #allocation6 [shape = 's32[2]{0}', space=sflag, size = 0x8, scoped, tag = 'scoped memory for tpu_custom_call.1']
    #allocation7 [shape = 'u8[2048]{0}', space=vmem, size = 0x800, scoped, tag = 'output window, operand 0']
    %7 = vsyncpa [#allocation3], 0
    %s8 = scalar_lea.sflag [#allocation3], 1
    %9 = vsyncpa %s8, 0
    %10 = vsyncpa [#allocation6], 0
    %s11 = scalar_lea.sflag [#allocation6], 1
    %12 = vsyncpa %s11, 0
    %13 = vsyncpa [#allocation4], 0
    %s14 = scalar_lea.sflag [#allocation4], 1
    %15 = vsyncpa %s14, 0
    loop: start=0, step=1, limit=4
    $region2: #{tpu_custom_call.1} parent=1 // loop_pre_header
      _
    $region3: #{tpu_custom_call.1} parent=1 // loop_header
      %s17 = sphi 0, %s21
      %p18 = scmp.ge.s32.totalorder %s17, 4
      %s24 = sphi 0, %s36
      %s25 = sphi 0, %s32
      %s26 = sphi 0, %s24
      %s27 = sphi 0, %s25
      %s28 = sphi 0, %s26
      %s29 = sphi 0, %s27
      %s41 = sphi 0, %s43
      %s44 = sphi 0, %s41
      %s45 = sphi 0, %s44
      %s61 = sphi 0, %s45
      %s69 = sphi 0, %s71
      %s72 = sphi 0, %s69
      %s73 = sphi 0, %s72
      %s89 = sphi 0, %s73
      %s97 = sphi 0, %s99
      %s100 = sphi 0, %s97
      %s101 = sphi 0, %s100
      %s117 = sphi 0, %s101
    $region4: #{tpu_custom_call.1} parent=1 // loop_header_branch
      %20 = sbr.rel (%p18) target = $region8
    $region5: #{tpu_custom_call.1} parent=1 // loop_body
      %s22 = ssub.s32 %s17, 1
      %s23 = ssub.s32 %s17, 2
      %s30 = sadd.s32 1, %s25
      %p31 = scmp.ge.s32.totalorder %s30, 1
      %s32 = scalar_select %p31, 0, %s30
      %s33 = sadd.s32 1, %s24
      %s34 = scalar_select %p31, %s33, %s24
      %p35 = scmp.ge.s32.totalorder %s34, 2
      %s36 = scalar_select %p35, 0, %s34
      %s37 = ssub.s32 %s24, %s36
      %s38 = ssub.s32 %s25, %s32
      %s39 = sor.u32 %s37, %s38
      %p40 = scmp.eq.s32.totalorder %s39, 0
      %s42 = sadd.s32 %s41, 1
      %s43 = scalar_select %p40, %s41, %s42
      %p46 = pneg %p40
      %p47 = scmp.eq.s32.totalorder %s17, 1
      %p48 = por %p46, %p47
      %p49 = scmp.ne.s32.totalorder %s41, %s44
      %p50 = scmp.eq.s32.totalorder %s17, 0
      %p51 = por %p49, %p50
      %p52 = scmp.ne.s32.totalorder %s41, %s44
      %p53 = scmp.eq.s32.totalorder %s22, 1
      %p54 = por %p52, %p53
      %p55 = scmp.ne.s32.totalorder %s44, %s45
      %p56 = scmp.eq.s32.totalorder %s22, 0
      %p57 = por %p55, %p56
      %p58 = scmp.ne.s32.totalorder %s44, %s45
      %p59 = scmp.eq.s32.totalorder %s23, 1
      %p60 = por %p58, %p59
      %p62 = scmp.ne.s32.totalorder %s45, %s61
      %p63 = scmp.eq.s32.totalorder %s23, 0
      %p64 = por %p62, %p63
      %s65 = ssub.s32 %s24, %s36
      %s66 = ssub.s32 %s25, %s32
      %s67 = sor.u32 %s65, %s66
      %p68 = scmp.eq.s32.totalorder %s67, 0
      %s70 = sadd.s32 %s69, 1
      %s71 = scalar_select %p68, %s69, %s70
      %p74 = pneg %p68
      %p75 = scmp.eq.s32.totalorder %s17, 1
      %p76 = por %p74, %p75
      %p77 = scmp.ne.s32.totalorder %s69, %s72
      %p78 = scmp.eq.s32.totalorder %s17, 0
      %p79 = por %p77, %p78
      %p80 = scmp.ne.s32.totalorder %s69, %s72
      %p81 = scmp.eq.s32.totalorder %s22, 1
      %p82 = por %p80, %p81
      %p83 = scmp.ne.s32.totalorder %s72, %s73
      %p84 = scmp.eq.s32.totalorder %s22, 0
      %p85 = por %p83, %p84
      %p86 = scmp.ne.s32.totalorder %s72, %s73
      %p87 = scmp.eq.s32.totalorder %s23, 1
      %p88 = por %p86, %p87
      %p90 = scmp.ne.s32.totalorder %s73, %s89
      %p91 = scmp.eq.s32.totalorder %s23, 0
      %p92 = por %p90, %p91
      %s93 = ssub.s32 %s24, %s36
      %s94 = ssub.s32 %s25, %s32
      %s95 = sor.u32 %s93, %s94
      %p96 = scmp.eq.s32.totalorder %s95, 0
      %s98 = sadd.s32 %s97, 1
      %s99 = scalar_select %p96, %s97, %s98
      %p102 = pneg %p96
      %p103 = scmp.eq.s32.totalorder %s17, 1
      %p104 = por %p102, %p103
      %p105 = scmp.ne.s32.totalorder %s97, %s100
      %p106 = scmp.eq.s32.totalorder %s17, 0
      %p107 = por %p105, %p106
      %p108 = scmp.ne.s32.totalorder %s97, %s100
      %p109 = scmp.eq.s32.totalorder %s22, 1
      %p110 = por %p108, %p109
      %p111 = scmp.ne.s32.totalorder %s100, %s101
      %p112 = scmp.eq.s32.totalorder %s22, 0
      %p113 = por %p111, %p112
      %p114 = scmp.ne.s32.totalorder %s100, %s101
      %p115 = scmp.eq.s32.totalorder %s23, 1
      %p116 = por %p114, %p115
      %p118 = scmp.ne.s32.totalorder %s101, %s117
      %p119 = scmp.eq.s32.totalorder %s23, 0
      %p120 = por %p118, %p119
      %p121 = scmp.le.s32.totalorder 1, %s17
      %p122 = scmp.lt.s32.totalorder %s17, 3
      %p123 = pnand %p121, %p122
      %p124 = pneg %p123
      // Predicated region
      $region9: #{tpu_custom_call.1} parent=5 // pred_check
        _
      $region10: #{tpu_custom_call.1} parent=5 // pred_check_branch
        %126 = sbr.rel (%p123) target = $region12
      $region11: #{tpu_custom_call.1} parent=5 // pred_region
        %s127 = ssub.s32 %s17, 1
      $region12: #{tpu_custom_call.1} parent=5 // pred_fallthru
        _
      %p128 = scmp.lt.s32.totalorder %s17, 2
      // Predicated region
      $region13: #{tpu_custom_call.1} parent=5 // pred_check
        %p129 = pneg %p128
      $region14: #{tpu_custom_call.1} parent=5 // pred_check_branch
        %131 = sbr.rel (%p129) target = $region16
      $region15: #{tpu_custom_call.1} parent=5 // pred_region
        // Predicated region
        $region17: #{tpu_custom_call.1} parent=15 // pred_check
          %p132 = pneg %p51
        $region18: #{tpu_custom_call.1} parent=15 // pred_check_branch
          %134 = sbr.rel (%p132) target = $region20
        $region19: #{tpu_custom_call.1} parent=15 // pred_region
          %s135 = sand.u32 %s41, 1
          %s136 = scalar_lea.sflag [#allocation3], %s135
          %s137 = sand.u32 %s41, 1
          %s138 = smul.addr %s137, 8
          %s139 = scalar_lea.vmem [#allocation2], %s138
          %s140 = smul.u32 2, %s25
          %s142 = ssub.s32 128, 128
          %143 = vsyncadd %s136, %s142
          %s144 = smul.addr %s24, 2
          %s145 = sadd.s32 %s140, %s144
          %s146 = smul.addr %s145, 64
          %s147 = scalar_lea.hbm %s0, %s146
          %s149 = sshll.u32 %s139, 4
          %s150 = int_to_ptr.vmem [resolvable:$true] %s149
          %152 = dma.hbm_to_vmem [thread:$0]  %s147, 128, %s150, %s136
        $region20: #{tpu_custom_call.1} parent=15 // pred_fallthru
          _
        // Predicated region
        $region21: #{tpu_custom_call.1} parent=15 // pred_check
          %p153 = pneg %p79
        $region22: #{tpu_custom_call.1} parent=15 // pred_check_branch
          %155 = sbr.rel (%p153) target = $region24
        $region23: #{tpu_custom_call.1} parent=15 // pred_region
          %s156 = sand.u32 %s69, 1
          %s157 = scalar_lea.sflag [#allocation6], %s156
          %s158 = sand.u32 %s69, 1
          %s159 = smul.addr %s158, 2
          %s160 = scalar_lea.vmem [#allocation5], %s159
          %s161 = smul.u32 2, %s25
          %s163 = ssub.s32 32, 32
          %164 = vsyncadd %s157, %s163
          %s165 = smul.addr %s24, 2
          %s166 = sadd.s32 %s161, %s165
          %s167 = smul.addr %s166, 16
          %s168 = scalar_lea.hbm %s1, %s167
          %s170 = sshll.u32 %s160, 4
          %s171 = int_to_ptr.vmem [resolvable:$true] %s170
          %173 = dma.hbm_to_vmem [thread:$0]  %s168, 32, %s171, %s157
        $region24: #{tpu_custom_call.1} parent=15 // pred_fallthru
          _
      $region16: #{tpu_custom_call.1} parent=5 // pred_fallthru
        _
      %p174 = scmp.le.s32.totalorder 1, %s17
      %p175 = scmp.lt.s32.totalorder %s17, 3
      %p176 = pnand %p174, %p175
      %p177 = pneg %p176
      // Predicated region
      $region25: #{tpu_custom_call.1} parent=5 // pred_check
        _
      $region26: #{tpu_custom_call.1} parent=5 // pred_check_branch
        %179 = sbr.rel (%p176) target = $region28
      $region27: #{tpu_custom_call.1} parent=5 // pred_region
        %s180 = ssub.s32 %s17, 1
        %s181 = sand.u32 %s44, 1
        %s182 = scalar_lea.sflag [#allocation3], %s181
        %s183 = sand.u32 %s44, 1
        %s184 = smul.addr %s183, 8
        %s185 = scalar_lea.vmem [#allocation2], %s184
        // Predicated region
        $region29: #{tpu_custom_call.1} parent=27 // pred_check
          %p186 = pneg %p57
        $region30: #{tpu_custom_call.1} parent=27 // pred_check_branch
          %188 = sbr.rel (%p186) target = $region32
        $region31: #{tpu_custom_call.1} parent=27 // pred_region
          %189 = dma.done %s182, 128
        $region32: #{tpu_custom_call.1} parent=27 // pred_fallthru
          _
        %s190 = sand.u32 %s72, 1
        %s191 = scalar_lea.sflag [#allocation6], %s190
        %s192 = sand.u32 %s72, 1
        %s193 = smul.addr %s192, 2
        %s194 = scalar_lea.vmem [#allocation5], %s193
        // Predicated region
        $region33: #{tpu_custom_call.1} parent=27 // pred_check
          %p195 = pneg %p85
        $region34: #{tpu_custom_call.1} parent=27 // pred_check_branch
          %197 = sbr.rel (%p195) target = $region36
        $region35: #{tpu_custom_call.1} parent=27 // pred_region
          %198 = dma.done %s191, 32
        $region36: #{tpu_custom_call.1} parent=27 // pred_fallthru
          _
        %s199 = sand.u32 %s44, 1
        %s200 = scalar_lea.sflag [#allocation3], %s199
        %s201 = sand.u32 %s44, 1
        %s202 = smul.addr %s201, 8
        %s203 = scalar_lea.vmem [#allocation2], %s202
        %p204 = pneg %p57
        %p205 = pneg %p54
        %s206 = sand.u32 %s72, 1
        %s207 = scalar_lea.sflag [#allocation6], %s206
        %s208 = sand.u32 %s72, 1
        %s209 = smul.addr %s208, 2
        %s210 = scalar_lea.vmem [#allocation5], %s209
        %p211 = pneg %p85
        %p212 = pneg %p82
        %p213 = pneg %p113
        %p214 = pneg %p110
        %s215 = sand.u32 %s100, 1
        %s216 = scalar_lea.sflag [#allocation4], %s215
        %s217 = sand.u32 %s100, 1
        %s218 = smul.addr %s217, 2
        %s219 = scalar_lea.vmem [#allocation7], %s218
        %s220 = smul.u32 2, %s27
        %s221 = smul.u32 2, %s27
        %s222 = smul.u32 2, %s27
        %v223 = vld [vmem:[%s185] sm:$0xff]
        %v224 = vld [vmem:[%s194] sm:$0x3]
        %vm225 = vcmp.ne.s32.totalorder %v224, 255
        %v226 = vsel %vm225, %v224, 0
        %v228 = vcombine.high %v223, %v223
        %vm230 = vcmask 1043456
        %v231 = vsel %vm230, %v223, -inf
        %v232 = vrot.slane %v231, 4
        %v233 = vmax.f32 %v231, %v232
        %v234 = vrot.slane %v233, 2
        %v235 = vmax.f32 %v233, %v234
        %v236 = vrot.slane %v235, 1
        %v237 = vmax.f32 %v235, %v236
        %v238 = vsel %vm230, %v228, -inf
        %v239 = vrot.slane %v238, 4
        %v240 = vmax.f32 %v238, %v239
        %v241 = vrot.slane %v240, 2
        %v242 = vmax.f32 %v240, %v241
        %v243 = vrot.slane %v242, 1
        %v244 = vmax.f32 %v242, %v243
        %v247 = vcombine.low %v237, %v244
        %v249 = vsub.f32 %v223, %v247
        %v250 = vmul.f32 %v249, 1.442695
        %v251 = vpow.pop %v250
        %v253 = vcombine.high %v251, %v251
        %v255 = vsel %vm230, %v251, 0.0
        %v256 = vrot.slane %v255, 4
        %v257 = vadd.f32 %v255, %v256
        %v258 = vrot.slane %v257, 2
        %v259 = vadd.f32 %v257, %v258
        %v260 = vrot.slane %v259, 1
        %v261 = vadd.f32 %v259, %v260
        %v262 = vsel %vm230, %v253, 0.0
        %v263 = vrot.slane %v262, 4
        %v264 = vadd.f32 %v262, %v263
        %v265 = vrot.slane %v264, 2
        %v266 = vadd.f32 %v264, %v265
        %v267 = vrot.slane %v266, 1
        %v268 = vadd.f32 %v266, %v267
        %v269 = vlog2.pop %v261
        %v270 = vmul.f32 %v269, 0.6931472
        %v271 = vlog2.pop %v268
        %v272 = vmul.f32 %v271, 0.6931472
        %v273 = vlaneseq
        %v274 = vshrl.u32 %v273, 7
        %v275 = vlaneseq
        %v276 = vshrl.u32 %v275, 7
        %v277 = vsub.s32 0, %v276
        %v278 = vrot.slane %v226, %v277
        %v279 = vlaneseq
        %v280 = vshrl.u32 %v279, 7
        %v281 = vsub.s32 1, %v280
        %v282 = vrot.slane %v226, %v281
        %vm283 = vcmp.eq.s32.totalorder %v274, %v278
        %vm284 = vcmp.eq.s32.totalorder %v274, %v282
        %v285 = vsel %vm283, 1, 0
        %v286 = vsel %vm284, 1, 0
        %v287 = vcvt.s32.f32 %v285
        %v288 = vcvt.s32.f32 %v286
        %v291 = vcombine.low %v287, %v288
        %v293 = vmul.f32 %v223, %v291
        %v295 = vcombine.high %v293, %v293
        %v297 = vsel %vm230, %v293, 0.0
        %v298 = vrot.slane %v297, 4
        %v299 = vadd.f32 %v297, %v298
        %v300 = vrot.slane %v299, 2
        %v301 = vadd.f32 %v299, %v300
        %v302 = vrot.slane %v301, 1
        %v303 = vadd.f32 %v301, %v302
        %v304 = vsel %vm230, %v295, 0.0
        %v305 = vrot.slane %v304, 4
        %v306 = vadd.f32 %v304, %v305
        %v307 = vrot.slane %v306, 2
        %v308 = vadd.f32 %v306, %v307
        %v309 = vrot.slane %v308, 1
        %v310 = vadd.f32 %v308, %v309
        %v311 = vsub.f32 %v303, %v237
        %v312 = vsub.f32 %v310, %v244
        %v313 = vsub.f32 %v311, %v270
        %v314 = vsub.f32 %v312, %v272
        %v315 = vmul.f32 %v313, 1.442695
        %v316 = vpow.pop %v315
        %v317 = vmul.f32 %v314, 1.442695
        %v318 = vpow.pop %v317
        %v319 = vsub.f32 1.0, %v316
        %v320 = vsub.f32 1.0, %v318
        %v321 = vmul.f32 %v319, %v319
        %v322 = vmul.f32 %v320, %v320
        %v323 = vmul.f32 %v321, -1.0
        %v324 = vmul.f32 %v322, -1.0
        %v325 = vmul.f32 %v323, %v313
        %v326 = vmul.f32 %v324, %v314
        %v329 = vcombine.low %v325, %v326
        %v331 = vunpack.c.l.s4 1966171168
        %v332 = vunpack.c.0.s8 %v331
        %v333 = vlaneseq
        %v334 = vshrl.u32 %v333, 7
        %v335 = vsub.s32 %v332, %v334
        %v336 = vrot.slane %v329, %v335
        %v338 = vunpack.c.l.s4 1966171168
        %v339 = vunpack.c.0.s8 %v338
        %v340 = vlaneseq
        %v341 = vshrl.u32 %v340, 7
        %v342 = vsub.s32 %v339, %v341
        %v343 = vrot.slane %v336, %v342
        %v345 = vsel %vm225, %v343, 0.0
        %v346 = vlaneseq
        %vm347 = vcmp.ge.s32.totalorder %v346, 0
        %vm348 = vcmp.lt.s32.totalorder %v346, 256
        %vm349 = vmand %vm347, %vm348
        %350 = vst.msk [vmem:[%s219] sm:$0x3] %vm349, %v345
        %s351 = sand.u32 %s100, 1
        %s352 = scalar_lea.sflag [#allocation4], %s351
        %s353 = sand.u32 %s100, 1
        %s354 = smul.addr %s353, 2
        %s355 = scalar_lea.vmem [#allocation7], %s354
        // Predicated region
        $region37: #{tpu_custom_call.1} parent=27 // pred_check
          %p356 = pneg %p110
        $region38: #{tpu_custom_call.1} parent=27 // pred_check_branch
          %358 = sbr.rel (%p356) target = $region40
        $region39: #{tpu_custom_call.1} parent=27 // pred_region
          %s359 = smul.u32 2, %s27
          %s361 = ssub.s32 32, 32
          %362 = vsyncadd %s352, %s361
          %s363 = smul.addr %s26, 2
          %s364 = sadd.s32 %s359, %s363
          %s365 = smul.addr %s364, 16
          %s366 = scalar_lea.hbm %s2, %s365
          %s368 = sshll.u32 %s355, 4
          %s369 = int_to_ptr.vmem [resolvable:$true] %s368
          %371 = dma.vmem_to_hbm [thread:$0]  %s369, 32, %s366, %s352
        $region40: #{tpu_custom_call.1} parent=27 // pred_fallthru
          _
      $region28: #{tpu_custom_call.1} parent=5 // pred_fallthru
        _
      %p372 = scmp.le.s32.totalorder 2, %s17
      // Predicated region
      $region41: #{tpu_custom_call.1} parent=5 // pred_check
        %p373 = pneg %p372
      $region42: #{tpu_custom_call.1} parent=5 // pred_check_branch
        %375 = sbr.rel (%p373) target = $region44
      $region43: #{tpu_custom_call.1} parent=5 // pred_region
        %s376 = ssub.s32 %s17, 2
        // Predicated region
        $region45: #{tpu_custom_call.1} parent=43 // pred_check
          %p377 = pneg %p116
        $region46: #{tpu_custom_call.1} parent=43 // pred_check_branch
          %379 = sbr.rel (%p377) target = $region48
        $region47: #{tpu_custom_call.1} parent=43 // pred_region
          %s380 = sand.u32 %s101, 1
          %s381 = scalar_lea.sflag [#allocation4], %s380
          %s382 = sand.u32 %s101, 1
          %s383 = smul.addr %s382, 2
          %s384 = scalar_lea.vmem [#allocation7], %s383
          %385 = dma.done %s381, 32
        $region48: #{tpu_custom_call.1} parent=43 // pred_fallthru
          _
      $region44: #{tpu_custom_call.1} parent=5 // pred_fallthru
        _
    $region6: #{tpu_custom_call.1} parent=1 // loop_footer
      %s21 = sadd.s32 1, %s17
    $region7: #{tpu_custom_call.1} parent=1 // loop_footer_branch
      %16 = sbr.rel target = $region3
    $region8: #{tpu_custom_call.1} parent=1 // loop_exit
      _
    %386 = vsyncpa [#allocation3], 1
    %s387 = scalar_lea.sflag [#allocation3], 1
    %388 = vsyncpa %s387, 1
    %389 = vsyncpa [#allocation6], 1
    %s390 = scalar_lea.sflag [#allocation6], 1
    %391 = vsyncpa %s390, 1
    %392 = vsyncpa [#allocation4], 1
    %s393 = scalar_lea.sflag [#allocation4], 1
    %394 = vsyncpa %s393, 1

</llo_original>
